<compile_context>
chip_gen: v7x
topology: tpu7x:2x2x1
jax: 0.10.0
libtpu: 0.0.40
codegen_flags: <defaults>
</compile_context>

<pallas_src>
import jax
import jax.numpy as jnp
from jax.experimental import pallas as pl
from jax.experimental.pallas import tpu as pltpu

_LANES = 128

# threshold -> weight, ascending threshold order (later thresholds override)
_B_DICT = ((0.46, 2.0), (0.55, 5.0), (0.62, 10.0), (0.725, 30.0))


def _device_kind():
    try:
        return jax.devices()[0].device_kind.lower()
    except Exception:
        return ""


def _make_bmse_kernel(block_rows, per_split, n_rows, nb, ragged):
    """Builds the streaming-reduction kernel for a fixed static configuration."""

    def _partial(contrib):
        # Reduce (block_rows, 128) -> (8, 128) in-register (VALU adds only).
        if block_rows == 8:
            return contrib
        if block_rows % 8 == 0:
            return contrib.reshape(block_rows // 8, 8, _LANES).sum(axis=0)
        # Tiny / non-multiple-of-8 row count (single full-extent block only):
        # reduce fully along sublanes and place the row-sum in sublane 0.
        colsum = jnp.sum(contrib, axis=0, keepdims=True)            # (1, 128)
        row = jax.lax.broadcasted_iota(jnp.int32, (8, _LANES), 0)
        return jnp.where(row == 0,
                         jnp.broadcast_to(colsum, (8, _LANES)),
                         jnp.float32(0.0))

    def kernel(yp_ref, y_ref, out_ref):
        c = pl.program_id(0)          # core-split (parallel) axis
        i = pl.program_id(1)          # streaming reduction axis

        @pl.when(i == 0)
        def _init():
            out_ref[...] = jnp.zeros_like(out_ref)

        y = y_ref[...].astype(jnp.float32)
        yp = yp_ref[...].astype(jnp.float32)

        # get_weight: piecewise-constant weights from the ground-truth map.
        w = jnp.ones_like(y)
        for thresh, val in _B_DICT:
            w = jnp.where(y >= thresh, jnp.float32(val), w)

        d = yp - y
        contrib = w * d * d           # == (sqrt(w)*yp - sqrt(w)*y)^2, no sqrt

        if not ragged:
            # Mask-free path: every block is fully in range.
            out_ref[...] += _partial(contrib)[None]
        else:
            slot = c * per_split + i
            is_tail = slot == nb - 1

            @pl.when(jnp.logical_not(is_tail))
            def _fast():
                out_ref[...] += _partial(contrib)[None]

            @pl.when(is_tail)
            def _tail():
                # Only the partial last block needs the row mask; rows past the
                # logical slab end contain unspecified data and must be zeroed
                # via a select (NOT a multiplicative mask).
                row = jax.lax.broadcasted_iota(jnp.int32, contrib.shape, 0)
                valid = slot * block_rows + row < n_rows
                masked = jnp.where(valid, contrib, jnp.float32(0.0))
                out_ref[...] += _partial(masked)[None]

    return kernel


def bmse_loss(y_pred, y, reduction="mean", desired_block_rows=None):
    """Balanced MSE loss. y_pred, y: same shape (e.g. NCHW), floating dtype."""
    assert y_pred.shape == y.shape
    n_elems = y.size

    # Keep native dtype (bf16 stays bf16 in HBM); upcast happens in-kernel.
    yp_flat = jnp.ravel(y_pred)
    y_flat = jnp.ravel(y)

    rem = n_elems % _LANES
    if rem != 0:
        # TODO(synk): this branch copies both inputs (jnp.pad); avoiding it for
        # non-multiple-of-128 sizes needs a manual-DMA tail path. Typical NN
        # tensor sizes are multiples of 128 and skip it entirely.
        pad = _LANES - rem
        yp_flat = jnp.pad(yp_flat, (0, pad))
        y_flat = jnp.pad(y_flat, (0, pad))
    n_rows = yp_flat.size // _LANES   # zero-pad rows contribute 0 (w=1, d=0)

    yp2d = yp_flat.reshape(n_rows, _LANES)   # free reshape (contiguous)
    y2d = y_flat.reshape(n_rows, _LANES)

    kind = _device_kind()
    is_v7x = ("v7" in kind) or ("7x" in kind)
    big_vmem = is_v7x or ("v6" in kind)

    if desired_block_rows is None:
        # 8192 rows = 4 MiB f32/tile (16 MiB double-buffered for 2 inputs) on
        # v6e/v7x; 4096 rows = 2 MiB/tile (8 MiB) on v5e / unknown chips.
        desired_block_rows = 8192 if big_vmem else 4096

    if n_rows <= desired_block_rows:
        block_rows = n_rows           # full extent (legal even if % 8 != 0)
        nb = 1
    else:
        block_rows = desired_block_rows
        nb = (n_rows + block_rows - 1) // block_rows

    ragged = nb * block_rows != n_rows

    # 2-way split only on v7x (2 TensorCores) and only when it creates no
    # clamped/duplicate slot (even block count); otherwise a single clean pass.
    if is_v7x and nb >= 2 and nb % 2 == 0:
        num_splits = 2
    else:
        num_splits = 1
    per_split = nb // num_splits

    kernel = _make_bmse_kernel(block_rows, per_split, n_rows, nb, ragged)

    def in_map(c, i):
        return (c * per_split + i, 0)

    bytes_accessed = (n_elems * (y_pred.dtype.itemsize + y.dtype.itemsize)
                      + num_splits * 8 * _LANES * 4)

    out = pl.pallas_call(
        kernel,
        out_shape=jax.ShapeDtypeStruct((num_splits, 8, _LANES), jnp.float32),
        grid_spec=pltpu.PrefetchScalarGridSpec(
            num_scalar_prefetch=0,
            grid=(num_splits, per_split),
            in_specs=[
                pl.BlockSpec((block_rows, _LANES), in_map),
                pl.BlockSpec((block_rows, _LANES), in_map),
            ],
            # Resident output block along the reduction axis = accumulator.
            out_specs=pl.BlockSpec((1, 8, _LANES), lambda c, i: (c, 0, 0)),
        ),
        compiler_params=pltpu.CompilerParams(
            dimension_semantics=("parallel", "arbitrary"),
        ),
        cost_estimate=pl.CostEstimate(
            flops=12 * n_elems,
            transcendentals=0,
            bytes_accessed=bytes_accessed,
        ),
    )(yp2d, y2d)

    total = jnp.sum(out)              # tiny (num_splits, 8, 128) reduce in XLA
    if reduction == "mean":
        return total / jnp.float32(n_elems)
    elif reduction == "sum":
        return total
    else:
        # TODO(synk): reduction='none' (elementwise map) not implemented here.
        raise ValueError(f"unsupported reduction: {reduction}")


def _bmse_ref(y_pred, y):
    w = jnp.ones_like(y)
    for thresh, val in _B_DICT:
        w = jnp.where(y >= thresh, jnp.float32(val), w)
    sw = jnp.sqrt(w)
    return jnp.mean((sw * y_pred - sw * y) ** 2)


if __name__ == "__main__":
    key = jax.random.PRNGKey(0)
    k1, k2, k3, k4, k5, k6, k7, k8 = jax.random.split(key, 8)

    # 1) Primary check: small NCHW shape from the module spec (single block).
    shape = (2, 4, 16, 16)
    y_pred = jax.random.uniform(k1, shape, dtype=jnp.float32)
    y = jax.random.uniform(k2, shape, dtype=jnp.float32)
    loss = jax.block_until_ready(bmse_loss(y_pred, y, reduction="mean"))
    ref = _bmse_ref(y_pred, y)
    assert jnp.allclose(loss, ref, rtol=1e-5, atol=1e-6), (loss, ref)

    # 2) Multi-block + ragged-tail (+ 2-TC split on v7x) path: 1152 rows with a
    #    forced 160-row tile -> 8 blocks, partial last block.
    shape2 = (4, 8, 36, 128)
    y_pred2 = jax.random.uniform(k3, shape2, dtype=jnp.float32)
    y2 = jax.random.uniform(k4, shape2, dtype=jnp.float32)
    loss2 = jax.block_until_ready(
        bmse_loss(y_pred2, y2, reduction="mean", desired_block_rows=160))
    ref2 = _bmse_ref(y_pred2, y2)
    assert jnp.allclose(loss2, ref2, rtol=1e-4, atol=1e-6), (loss2, ref2)

    # 3) Non-multiple-of-8 row count (5 rows) -> in-kernel sublane-reduce path.
    shape3 = (2, 2, 10, 16)
    y_pred3 = jax.random.uniform(k5, shape3, dtype=jnp.float32)
    y3 = jax.random.uniform(k6, shape3, dtype=jnp.float32)
    loss3 = jax.block_until_ready(bmse_loss(y_pred3, y3, reduction="mean"))
    ref3 = _bmse_ref(y_pred3, y3)
    assert jnp.allclose(loss3, ref3, rtol=1e-5, atol=1e-6), (loss3, ref3)

    # 4) Non-multiple-of-128 element count -> lane-pad path.
    shape4 = (3, 7, 11)
    y_pred4 = jax.random.uniform(k7, shape4, dtype=jnp.float32)
    y4 = jax.random.uniform(k8, shape4, dtype=jnp.float32)
    loss4 = jax.block_until_ready(bmse_loss(y_pred4, y4, reduction="mean"))
    ref4 = _bmse_ref(y_pred4, y4)
    assert jnp.allclose(loss4, ref4, rtol=1e-5, atol=1e-6), (loss4, ref4)

    print("KERNEL_OK")
</pallas_src>

<mosaic_0001>
module attributes {stable_mosaic.version = 11 : i64} {
  func.func @kernel(%arg0: i32, %arg1: i32, %arg2: memref<16x128xf32, #tpu.memory_space<vmem>>, %arg3: memref<16x128xf32, #tpu.memory_space<vmem>>, %arg4: memref<1x8x128xf32, #tpu.memory_space<vmem>>) attributes {dimension_semantics = [#tpu.dimension_semantics<parallel>, #tpu.dimension_semantics<arbitrary>], iteration_bounds = array<i64: 1, 1>, scalar_prefetch = 0 : i64, scratch_operands = 0 : i64, tpu.core_type = #tpu.core_type<tc>, window_params = [{transform_indices = @transform_0, window_bounds = array<i64: 16, 128>}, {transform_indices = @transform_1, window_bounds = array<i64: 16, 128>}, {transform_indices = @transform_2, window_bounds = array<i64: 1, 8, 128>}]} {
    %c0_i32 = arith.constant 0 : i32
    %0 = arith.cmpi eq, %arg1, %c0_i32 : i32
    %1 = arith.extui %0 : i1 to i32
    %c0_i32_0 = arith.constant 0 : i32
    %2 = arith.cmpi ne, %1, %c0_i32_0 : i32
    scf.if %2 {
      %cst_19 = arith.constant 0.000000e+00 : f32
      %31 = vector.broadcast %cst_19 : f32 to vector<1x8x128xf32>
      %c0_20 = arith.constant 0 : index
      %c0_21 = arith.constant 0 : index
      %c0_22 = arith.constant 0 : index
      %32 = vector.load %arg4[%c0_20, %c0_21, %c0_22] : memref<1x8x128xf32, #tpu.memory_space<vmem>>, vector<1x8x128xf32>
      tpu.vector_store %arg4[%c0_20, %c0_21, %c0_22], %31 {strides = array<i32>} : memref<1x8x128xf32, #tpu.memory_space<vmem>>, vector<1x8x128xf32>,
    } else {
    }
    %c0 = arith.constant 0 : index
    %c0_1 = arith.constant 0 : index
    %3 = vector.load %arg3[%c0, %c0_1] : memref<16x128xf32, #tpu.memory_space<vmem>>, vector<16x128xf32>
    %c0_2 = arith.constant 0 : index
    %c0_3 = arith.constant 0 : index
    %4 = vector.load %arg2[%c0_2, %c0_3] : memref<16x128xf32, #tpu.memory_space<vmem>>, vector<16x128xf32>
    %cst = arith.constant 1.000000e+00 : f32
    %5 = vector.broadcast %cst : f32 to vector<16x128xf32>
    %cst_4 = arith.constant 4.600000e-01 : f32
    %6 = vector.broadcast %cst_4 : f32 to vector<16x128xf32>
    %7 = arith.cmpf oge, %3, %6 : vector<16x128xf32>
    %cst_5 = arith.constant 2.000000e+00 : f32
    %8 = vector.broadcast %cst_5 : f32 to vector<16x128xf32>
    %9 = arith.select %7, %8, %5 : vector<16x128xi1>, vector<16x128xf32>
    %cst_6 = arith.constant 5.500000e-01 : f32
    %10 = vector.broadcast %cst_6 : f32 to vector<16x128xf32>
    %11 = arith.cmpf oge, %3, %10 : vector<16x128xf32>
    %cst_7 = arith.constant 5.000000e+00 : f32
    %12 = vector.broadcast %cst_7 : f32 to vector<16x128xf32>
    %13 = arith.select %11, %12, %9 : vector<16x128xi1>, vector<16x128xf32>
    %cst_8 = arith.constant 6.200000e-01 : f32
    %14 = vector.broadcast %cst_8 : f32 to vector<16x128xf32>
    %15 = arith.cmpf oge, %3, %14 : vector<16x128xf32>
    %cst_9 = arith.constant 1.000000e+01 : f32
    %16 = vector.broadcast %cst_9 : f32 to vector<16x128xf32>
    %17 = arith.select %15, %16, %13 : vector<16x128xi1>, vector<16x128xf32>
    %cst_10 = arith.constant 7.250000e-01 : f32
    %18 = vector.broadcast %cst_10 : f32 to vector<16x128xf32>
    %19 = arith.cmpf oge, %3, %18 : vector<16x128xf32>
    %cst_11 = arith.constant 3.000000e+01 : f32
    %20 = vector.broadcast %cst_11 : f32 to vector<16x128xf32>
    %21 = arith.select %19, %20, %17 : vector<16x128xi1>, vector<16x128xf32>
    %22 = arith.subf %4, %3 : vector<16x128xf32>
    %23 = arith.mulf %21, %22 : vector<16x128xf32>
    %24 = arith.mulf %23, %22 : vector<16x128xf32>
    %c0_12 = arith.constant 0 : index
    %c0_13 = arith.constant 0 : index
    %c0_14 = arith.constant 0 : index
    %25 = vector.load %arg4[%c0_12, %c0_13, %c0_14] : memref<1x8x128xf32, #tpu.memory_space<vmem>>, vector<1x8x128xf32>
    %26 = vector.shape_cast %24 : vector<16x128xf32> to vector<2x8x128xf32>
    %cst_15 = arith.constant dense<0.000000e+00> : vector<8x128xf32>
    %27 = vector.multi_reduction <add>, %26, %cst_15 [0] : vector<2x8x128xf32> to vector<8x128xf32>
    %28 = vector.shape_cast %27 : vector<8x128xf32> to vector<1x8x128xf32>
    %29 = arith.addf %25, %28 : vector<1x8x128xf32>
    %c0_16 = arith.constant 0 : index
    %c0_17 = arith.constant 0 : index
    %c0_18 = arith.constant 0 : index
    %30 = vector.load %arg4[%c0_16, %c0_17, %c0_18] : memref<1x8x128xf32, #tpu.memory_space<vmem>>, vector<1x8x128xf32>
    tpu.vector_store %arg4[%c0_16, %c0_17, %c0_18], %29 {strides = array<i32>} : memref<1x8x128xf32, #tpu.memory_space<vmem>>, vector<1x8x128xf32>,
    return
  }
  func.func @transform_0(%arg0: i32, %arg1: i32) -> (i32, i32) {
    %c1_i32 = arith.constant 1 : i32
    %0 = arith.muli %arg0, %c1_i32 : i32
    %1 = arith.addi %0, %arg1 : i32
    %c0_i32 = arith.constant 0 : i32
    %c0_i32_0 = arith.constant 0 : i32
    return %1, %c0_i32 : i32, i32
  }
  func.func @transform_1(%arg0: i32, %arg1: i32) -> (i32, i32) {
    %c1_i32 = arith.constant 1 : i32
    %0 = arith.muli %arg0, %c1_i32 : i32
    %1 = arith.addi %0, %arg1 : i32
    %c0_i32 = arith.constant 0 : i32
    %c0_i32_0 = arith.constant 0 : i32
    return %1, %c0_i32 : i32, i32
  }
  func.func @transform_2(%arg0: i32, %arg1: i32) -> (i32, i32, i32) {
    %c0_i32 = arith.constant 0 : i32
    %c0_i32_0 = arith.constant 0 : i32
    %c0_i32_1 = arith.constant 0 : i32
    return %arg0, %c0_i32, %c0_i32_0 : i32, i32, i32
  }
}

</mosaic_0001>

<llo_original>
// kernel: tpu_custom_call.1
$region0: #{tpu_custom_call.1}
  #allocation0 [shape = 'u32[]', space=smem, size = 0x4, offset = 0x4, fixed_abs, tag = 'smem constant byte address 0x4 - core index']
  #allocation1 [shape = 'u32[144,128]{1,0:T(1,128)}', space=vmem, size = 0x12000, scoped, tag = 'internal scratch']
  %s0 = inlined_call_operand.hbm [shape: f32[16,128], index: 0, kind: input, shape index: {}]
  %s1 = inlined_call_operand.hbm [shape: f32[16,128], index: 1, kind: input, shape index: {}]
  %s2 = inlined_call_operand.hbm [shape: f32[1,8,128], index: 2, kind: output, shape index: {}]
  %s3 = sld [smem:[#allocation0]]
  $region30: #{tpu_custom_call.1} parent=0
    _
  %s5 = ssub.s32 1, %s3
  %s6 = scalar_select 0, %s5, %s3
  $region1: #{tpu_custom_call.1} parent=0
    #allocation2 [shape = 'u8[8192]{0}', space=vmem, size = 0x2000, scoped, tag = 'input window, operand 0, single buffered']
    #allocation3 [shape = 's32[1]{0}', space=sflag, size = 0x4, scoped, tag = 'scoped memory for tpu_custom_call.1']
    #allocation4 [shape = 's32[1]{0}', space=sflag, size = 0x4, scoped, tag = 'scoped memory for tpu_custom_call.1']
    #allocation5 [shape = 'u8[8192]{0}', space=vmem, size = 0x2000, scoped, tag = 'input window, operand 1, single buffered']
    #allocation6 [shape = 's32[1]{0}', space=sflag, size = 0x4, scoped, tag = 'scoped memory for tpu_custom_call.1']
    #allocation7 [shape = 'u8[4096]{0}', space=vmem, size = 0x1000, scoped, tag = 'output window, operand 0, single buffered']
    %7 = vsyncpa [#allocation3], 0
    %8 = vsyncpa [#allocation6], 0
    %9 = vsyncpa [#allocation4], 0
    // Predicated region
    $region2: #{tpu_custom_call.1} parent=1 // pred_check
      _
    $region3: #{tpu_custom_call.1} parent=1 // pred_check_branch
      %11 = sbr.rel (0) target = $region5
    $region4: #{tpu_custom_call.1} parent=1 // pred_region
      %s12 = sadd.s32 0, 0
      %s13 = smul.u32 2, %s12
      %s15 = ssub.s32 256, 256
      %16 = vsyncadd [#allocation3], %s15
      %s17 = smul.addr %s13, 128
      %s18 = scalar_lea.hbm %s0, %s17
      %s19 = sshll.u32 [#allocation2], 4
      %s20 = int_to_ptr.vmem [resolvable:$true] %s19
      %25 = dma.hbm_to_vmem [thread:$0]  %s18, 256, %s20, [#allocation3], 128, 128, 8
    $region5: #{tpu_custom_call.1} parent=1 // pred_fallthru
      _
    // Predicated region
    $region6: #{tpu_custom_call.1} parent=1 // pred_check
      _
    $region7: #{tpu_custom_call.1} parent=1 // pred_check_branch
      %27 = sbr.rel (0) target = $region9
    $region8: #{tpu_custom_call.1} parent=1 // pred_region
      %s28 = sadd.s32 0, 0
      %s29 = smul.u32 2, %s28
      %s31 = ssub.s32 256, 256
      %32 = vsyncadd [#allocation6], %s31
      %s33 = smul.addr %s29, 128
      %s34 = scalar_lea.hbm %s1, %s33
      %s35 = sshll.u32 [#allocation5], 4
      %s36 = int_to_ptr.vmem [resolvable:$true] %s35
      %41 = dma.hbm_to_vmem [thread:$0]  %s34, 256, %s36, [#allocation6], 128, 128, 8
    $region9: #{tpu_custom_call.1} parent=1 // pred_fallthru
      _
    // Predicated region
    $region10: #{tpu_custom_call.1} parent=1 // pred_check
      _
    $region11: #{tpu_custom_call.1} parent=1 // pred_check_branch
      %43 = sbr.rel (0) target = $region13
    $region12: #{tpu_custom_call.1} parent=1 // pred_region
      %44 = dma.done [#allocation3], 256
    $region13: #{tpu_custom_call.1} parent=1 // pred_fallthru
      _
    // Predicated region
    $region14: #{tpu_custom_call.1} parent=1 // pred_check
      _
    $region15: #{tpu_custom_call.1} parent=1 // pred_check_branch
      %46 = sbr.rel (0) target = $region17
    $region16: #{tpu_custom_call.1} parent=1 // pred_region
      %47 = dma.done [#allocation6], 256
    $region17: #{tpu_custom_call.1} parent=1 // pred_fallthru
      _
    %s48 = sadd.s32 0, 0
    %s49 = smul.u32 2, %s48
    %s50 = sadd.s32 0, 0
    %s51 = smul.u32 2, %s50
    %p52 = scmp.eq.s32.totalorder 0, 0
    // Predicated region
    $region18: #{tpu_custom_call.1} parent=1 // pred_check
      %p53 = pneg %p52
    $region19: #{tpu_custom_call.1} parent=1 // pred_check_branch
      %55 = sbr.rel (%p53) target = $region21
    $region20: #{tpu_custom_call.1} parent=1 // pred_region
      %56 = vst [vmem:[#allocation7] sm:$0xff] 0.0
    $region21: #{tpu_custom_call.1} parent=1 // pred_fallthru
      _
    %v57 = vld [vmem:[#allocation5] sm:$0xff]
    %v58 = vld [vmem:[#allocation5 + $0x8] sm:$0xff]
    %v59 = vld [vmem:[#allocation2] sm:$0xff]
    %v60 = vld [vmem:[#allocation2 + $0x8] sm:$0xff]
    %vm61 = vcmp.ge.f32.partialorder %v57, 0.46
    %vm62 = vcmp.ge.f32.partialorder %v58, 0.46
    %v63 = vsel %vm61, 2.0, 1.0
    %v64 = vsel %vm62, 2.0, 1.0
    %vm65 = vcmp.ge.f32.partialorder %v57, 0.55
    %vm66 = vcmp.ge.f32.partialorder %v58, 0.55
    %v67 = vsel %vm65, 5.0, %v63
    %v68 = vsel %vm66, 5.0, %v64
    %vm69 = vcmp.ge.f32.partialorder %v57, 0.62
    %vm70 = vcmp.ge.f32.partialorder %v58, 0.62
    %v71 = vsel %vm69, 10.0, %v67
    %v72 = vsel %vm70, 10.0, %v68
    %vm73 = vcmp.ge.f32.partialorder %v57, 0.725
    %vm74 = vcmp.ge.f32.partialorder %v58, 0.725
    %v75 = vsel %vm73, 30.0, %v71
    %v76 = vsel %vm74, 30.0, %v72
    %v77 = vsub.f32 %v59, %v57
    %v78 = vsub.f32 %v60, %v58
    %v79 = vmul.f32 %v75, %v77
    %v80 = vmul.f32 %v76, %v78
    %v81 = vmul.f32 %v79, %v77
    %v82 = vmul.f32 %v80, %v78
    %v83 = vld [vmem:[#allocation7] sm:$0xff]
    %v84 = vadd.f32 %v81, %v82
    %v85 = vadd.f32 %v83, %v84
    %86 = vst [vmem:[#allocation7] sm:$0xff] %v85
    // Predicated region
    $region22: #{tpu_custom_call.1} parent=1 // pred_check
      _
    $region23: #{tpu_custom_call.1} parent=1 // pred_check_branch
      %88 = sbr.rel (0) target = $region25
    $region24: #{tpu_custom_call.1} parent=1 // pred_region
      %s90 = ssub.s32 128, 128
      %91 = vsyncadd [#allocation4], %s90
      %s93 = sshll.u32 [#allocation7], 4
      %s94 = int_to_ptr.vmem [resolvable:$true] %s93
      %96 = dma.vmem_to_hbm [thread:$0]  %s94, 128, %s2, [#allocation4]
    $region25: #{tpu_custom_call.1} parent=1 // pred_fallthru
      _
    // Predicated region
    $region26: #{tpu_custom_call.1} parent=1 // pred_check
      _
    $region27: #{tpu_custom_call.1} parent=1 // pred_check_branch
      %98 = sbr.rel (0) target = $region29
    $region28: #{tpu_custom_call.1} parent=1 // pred_region
      %99 = dma.done [#allocation4], 128
    $region29: #{tpu_custom_call.1} parent=1 // pred_fallthru
      _
    %100 = vsyncpa [#allocation3], 1
    %101 = vsyncpa [#allocation6], 1
    %102 = vsyncpa [#allocation4], 1

</llo_original>
